<compile_context>
chip_gen: v7x
topology: tpu7x:2x2x1
jax: 0.10.0
libtpu: 0.0.40
codegen_flags: <defaults>
</compile_context>

<pallas_src>
import functools

import jax
import jax.numpy as jnp
import numpy as np
from jax import lax
from jax.experimental import pallas as pl
from jax.experimental.pallas import tpu as pltpu

_LANES = 128
_VMEM_LIMIT_BYTES = 48 * 1024 * 1024   # raise v5e's 16 MiB default; safe within v7x's 64 MiB
_VMEM_TILE_BUDGET = 40 * 1024 * 1024   # tile-sizing budget with headroom below the limit


def _round_up(x, m):
  return (x + m - 1) // m * m


# ----------------------------- Pallas kernel ------------------------------ #
def _matmul_bias_act_kernel(x_ref, w_ref, b_ref, o_ref, *, relu):
  """One grid step: o = relu(x @ w + b) for one (tm, Cpad) output tile.

  BN scale is pre-folded into w; the shortcut branch (1x1 conv + BN, or the
  identity residual as an identity-weight 1x1 conv) is pre-folded into the
  contraction dim, so a single MXU pass and a single bias add suffice.
  """
  y = jnp.dot(x_ref[...], w_ref[...], preferred_element_type=jnp.float32)
  y = y + b_ref[...]
  if relu:
    y = jnp.maximum(y, 0.0)
  o_ref[...] = y.astype(o_ref.dtype)


def _pick_tm(M, Kd, Cpad, out_bytes):
  """Largest M-tile fitting the VMEM budget (double-buffered streams), capped,
  then split so the 1-D grid has >= 2 steps (v7x megacore has 2 TensorCores)."""
  fixed = 2 * (Kd * Cpad * 2 + Cpad * 4)        # resident weight + bias (dbl-buffered)
  per_row = 2 * (Kd * 2 + Cpad * out_bytes)     # streamed bf16 x-tile + out-tile
  tm = max(8, (_VMEM_TILE_BUDGET - fixed) // per_row)
  tm = min(int(tm), 1024)                       # big tiles amortize ~0.35us/step
  tm = min(tm, _round_up(M, 8))
  tm = max(8, (tm // 8) * 8)
  if _round_up(M, tm) // tm < 2 and M > 8:      # give the megacore >= 2 grid steps
    tm = max(8, _round_up((M + 1) // 2, 8))
  return tm


def _matmul_bias_relu(x_cols, w_mat, bias, *, relu=True, out_dtype=jnp.bfloat16):
  """(M, K) x (K, Cout) matmul + bias (+ReLU) on the MXU, tiled over M."""
  M, Kd = x_cols.shape
  Cout = w_mat.shape[-1]
  Cpad = _round_up(Cout, _LANES)                # lane-dense (unmasked) output store
  out_bytes = jnp.dtype(out_dtype).itemsize
  tm = _pick_tm(M, Kd, Cpad, out_bytes)
  M_pad = _round_up(M, tm)

  x_cols = jnp.pad(x_cols.astype(jnp.bfloat16), ((0, M_pad - M), (0, 0)))
  w_mat = jnp.pad(w_mat.astype(jnp.bfloat16), ((0, 0), (0, Cpad - Cout)))
  bias = jnp.pad(bias.reshape(1, Cout).astype(jnp.float32),
                 ((0, 0), (0, Cpad - Cout)))

  cost = pl.CostEstimate(
      flops=2 * M_pad * Kd * Cpad,
      transcendentals=0,
      bytes_accessed=(M_pad * Kd * 2 + Kd * Cpad * 2 + Cpad * 4
                      + M_pad * Cpad * out_bytes))

  out = pl.pallas_call(
      functools.partial(_matmul_bias_act_kernel, relu=relu),
      out_shape=jax.ShapeDtypeStruct((M_pad, Cpad), out_dtype),
      grid_spec=pltpu.PrefetchScalarGridSpec(
          num_scalar_prefetch=0,
          grid=(M_pad // tm,),
          in_specs=[
              pl.BlockSpec((tm, Kd), lambda i: (i, 0)),     # streamed activations
              pl.BlockSpec((Kd, Cpad), lambda i: (0, 0)),   # resident fused weight
              pl.BlockSpec((1, Cpad), lambda i: (0, 0)),    # resident fused bias
          ],
          out_specs=pl.BlockSpec((tm, Cpad), lambda i: (i, 0)),
      ),
      compiler_params=pltpu.CompilerParams(
          dimension_semantics=("parallel",),
          vmem_limit_bytes=_VMEM_LIMIT_BYTES),
      cost_estimate=cost,
  )(x_cols, w_mat, bias)
  return out[:M, :Cout]


# ------------------------------ JAX glue ---------------------------------- #
def _im2col(x, ksize, stride, pad):
  """x: NHWC -> (N*Ho*Wo, ksize*ksize*C); tap order (kh, kw, c) matches a
  (kh, kw, Cin, Cout) weight reshaped to (ksize*ksize*Cin, Cout)."""
  N, H, W, C = x.shape
  Ho = (H + 2 * pad - ksize) // stride + 1
  Wo = (W + 2 * pad - ksize) // stride + 1
  xp = jnp.pad(x, ((0, 0), (pad, pad), (pad, pad), (0, 0)))
  cols = []
  for kh in range(ksize):
    for kw in range(ksize):
      win = lax.slice(
          xp,
          (0, kh, kw, 0),
          (N, kh + stride * (Ho - 1) + 1, kw + stride * (Wo - 1) + 1, C),
          (1, stride, stride, 1))
      cols.append(win.reshape(N * Ho * Wo, C))
  return jnp.concatenate(cols, axis=1), (N, Ho, Wo)


def _fold_bn(bn, eps=1e-5):
  scale = bn["gamma"] / jnp.sqrt(bn["var"] + eps)
  bias = bn["beta"] - bn["mean"] * scale
  return scale.astype(jnp.float32), bias.astype(jnp.float32)


# ------------------------- parameter initialization ----------------------- #
def _bn_params(key, c):
  k1, k2, k3, k4 = jax.random.split(key, 4)
  return dict(
      gamma=1.0 + 0.1 * jax.random.normal(k1, (c,), jnp.float32),
      beta=0.1 * jax.random.normal(k2, (c,), jnp.float32),
      mean=0.1 * jax.random.normal(k3, (c,), jnp.float32),
      var=1.0 + 0.1 * jnp.abs(jax.random.normal(k4, (c,), jnp.float32)),
  )


def init_basic_block(key, in_planes, planes, stride):
  ks = jax.random.split(key, 6)

  def conv_w(k, kh, kw, cin, cout):
    fan = kh * kw * cin
    return jax.random.normal(k, (kh, kw, cin, cout), jnp.float32) * (2.0 / fan) ** 0.5

  p = {
      "w1": conv_w(ks[0], 3, 3, in_planes, planes),
      "bn1": _bn_params(ks[1], planes),
      "w2": conv_w(ks[2], 3, 3, planes, planes),
      "bn2": _bn_params(ks[3], planes),
  }
  if stride != 1 or in_planes != planes:     # shortcut presence is structural (jit-friendly)
    p["wsc"] = conv_w(ks[4], 1, 1, in_planes, planes)
    p["bnsc"] = _bn_params(ks[5], planes)
  return p


# ------------------------------ forward pass ------------------------------ #
def basic_block_forward(x_nhwc, p, stride, out_dtype=jnp.bfloat16):
  planes = p["w1"].shape[-1]
  in_planes = x_nhwc.shape[-1]
  has_shortcut = "wsc" in p

  # bf16 cast ONCE before im2col: the 9x-expanded cols matrix is bf16 in HBM.
  x_bf16 = x_nhwc.astype(jnp.bfloat16)

  # conv1 (3x3, stride) + BN1 + ReLU; BN scale folded into the weight (f32 fold,
  # single bf16 cast); intermediate kept bf16.
  s1, b1 = _fold_bn(p["bn1"])
  w1 = (p["w1"].reshape(-1, planes) * s1).astype(jnp.bfloat16)
  cols1, (N, Ho, Wo) = _im2col(x_bf16, 3, stride, 1)
  y1 = _matmul_bias_relu(cols1, w1, b1, relu=True, out_dtype=jnp.bfloat16)
  out1 = y1.reshape(N, Ho, Wo, planes)

  # conv2 (3x3, stride 1) + BN2 + shortcut + ReLU as ONE matmul: shortcut taps
  # concatenated along the contraction dim (1x1 conv + BN when present, else the
  # identity residual as an identity-weight 1x1 conv).
  s2, b2 = _fold_bn(p["bn2"])
  w2 = (p["w2"].reshape(-1, planes) * s2).astype(jnp.bfloat16)
  cols2, _ = _im2col(out1, 3, 1, 1)
  if has_shortcut:
    ssc, bsc = _fold_bn(p["bnsc"])
    wsc = (p["wsc"].reshape(in_planes, planes) * ssc).astype(jnp.bfloat16)
    colssc, _ = _im2col(x_bf16, 1, stride, 0)     # 1x1 stride-s conv taps of x
    bias = b2 + bsc
  else:
    wsc = jnp.eye(planes, dtype=jnp.bfloat16)     # identity residual via MXU
    colssc = x_bf16.reshape(N * Ho * Wo, planes)
    bias = b2
  cols = jnp.concatenate([cols2, colssc], axis=1)
  w = jnp.concatenate([w2, wsc], axis=0)
  y = _matmul_bias_relu(cols, w, bias, relu=True, out_dtype=out_dtype)
  return y.reshape(N, Ho, Wo, planes)


# ------------------------- pure-JAX reference ----------------------------- #
def _ref_conv_bn(x, w, bn, stride, pad, relu, residual=None, eps=1e-5):
  y = lax.conv_general_dilated(
      x, w, window_strides=(stride, stride),
      padding=((pad, pad), (pad, pad)),
      dimension_numbers=("NHWC", "HWIO", "NHWC"))
  scale = bn["gamma"] / jnp.sqrt(bn["var"] + eps)
  y = y * scale + (bn["beta"] - bn["mean"] * scale)
  if residual is not None:
    y = y + residual
  if relu:
    y = jnp.maximum(y, 0.0)
  return y


def basic_block_reference(x_nhwc, p, stride):
  out1 = _ref_conv_bn(x_nhwc, p["w1"], p["bn1"], stride, 1, True)
  if "wsc" in p:
    sc = _ref_conv_bn(x_nhwc, p["wsc"], p["bnsc"], stride, 0, False)
  else:
    sc = x_nhwc
  return _ref_conv_bn(out1, p["w2"], p["bn2"], 1, 1, True, residual=sc)


# --------------------------------- main ------------------------------------ #
if __name__ == "__main__":
  key = jax.random.PRNGKey(0)
  kx, kp, kx2, kp2 = jax.random.split(key, 4)

  fwd = jax.jit(basic_block_forward, static_argnames=("stride", "out_dtype"))

  # Case 1: stride != 1 -> exercises the fused 1x1-conv shortcut path.
  N, in_planes, H, W = 2, 4, 16, 16
  planes, stride = 8, 2
  x_nchw = jax.random.normal(kx, (N, in_planes, H, W), jnp.float32)
  x_nhwc = jnp.transpose(x_nchw, (0, 2, 3, 1))            # NCHW -> NHWC
  params = init_basic_block(kp, in_planes, planes, stride)

  out = jax.block_until_ready(fwd(x_nhwc, params, stride=stride))
  assert out.shape == (N, H // stride, W // stride, planes), out.shape
  ref = basic_block_reference(x_nhwc, params, stride)
  # bf16 matmul operands, bf16 intermediate and bf16 output -> modest tolerance.
  np.testing.assert_allclose(np.array(out).astype(np.float32),
                             np.array(ref).astype(np.float32),
                             rtol=3e-2, atol=3e-2)

  # Case 2: stride == 1, in_planes == planes -> identity-residual path.
  x2 = jnp.transpose(
      jax.random.normal(kx2, (N, planes, H, W), jnp.float32), (0, 2, 3, 1))
  params2 = init_basic_block(kp2, planes, planes, 1)
  out2 = jax.block_until_ready(fwd(x2, params2, stride=1))
  assert out2.shape == (N, H, W, planes), out2.shape
  ref2 = basic_block_reference(x2, params2, 1)
  np.testing.assert_allclose(np.array(out2).astype(np.float32),
                             np.array(ref2).astype(np.float32),
                             rtol=3e-2, atol=3e-2)

  print("KERNEL_OK")
</pallas_src>

<mosaic_0001>
module attributes {stable_mosaic.version = 11 : i64} {
  func.func @_matmul_bias_act_kernel(%arg0: i32, %arg1: memref<64x36xbf16, #tpu.memory_space<vmem>>, %arg2: memref<36x128xbf16, #tpu.memory_space<vmem>>, %arg3: memref<1x128xf32, #tpu.memory_space<vmem>>, %arg4: memref<64x128xbf16, #tpu.memory_space<vmem>>) attributes {dimension_semantics = [#tpu.dimension_semantics<parallel>], iteration_bounds = array<i64: 2>, scalar_prefetch = 0 : i64, scratch_operands = 0 : i64, tpu.core_type = #tpu.core_type<tc>, window_params = [{transform_indices = @transform_0, window_bounds = array<i64: 64, 36>}, {pipeline_mode = #tpu.pipeline_mode<synchronous>, transform_indices = @transform_1, window_bounds = array<i64: 36, 128>}, {pipeline_mode = #tpu.pipeline_mode<synchronous>, transform_indices = @transform_2, window_bounds = array<i64: 1, 128>}, {transform_indices = @transform_3, window_bounds = array<i64: 64, 128>}]} {
    %c0 = arith.constant 0 : index
    %c0_0 = arith.constant 0 : index
    %0 = vector.load %arg1[%c0, %c0_0] : memref<64x36xbf16, #tpu.memory_space<vmem>>, vector<64x36xbf16>
    %c0_1 = arith.constant 0 : index
    %c0_2 = arith.constant 0 : index
    %1 = vector.load %arg2[%c0_1, %c0_2] : memref<36x128xbf16, #tpu.memory_space<vmem>>, vector<36x128xbf16>
    %cst = arith.constant dense<0.000000e+00> : vector<64x128xf32>
    %2 = tpu.matmul %0, %1, %cst {dimension_numbers = #tpu.dot_dimension_numbers<[1], [0], [0], [1], [0, 0, 1, 1], [], []>} : vector<64x36xbf16>, vector<36x128xbf16>, vector<64x128xf32> -> vector<64x128xf32>
    %c0_3 = arith.constant 0 : index
    %c0_4 = arith.constant 0 : index
    %3 = vector.load %arg3[%c0_3, %c0_4] : memref<1x128xf32, #tpu.memory_space<vmem>>, vector<1x128xf32>
    %4 = vector.broadcast %3 : vector<1x128xf32> to vector<64x128xf32>
    %5 = arith.addf %2, %4 : vector<64x128xf32>
    %cst_5 = arith.constant 0.000000e+00 : f32
    %6 = vector.broadcast %cst_5 : f32 to vector<64x128xf32>
    %7 = arith.maximumf %5, %6 : vector<64x128xf32>
    %8 = arith.truncf %7 : vector<64x128xf32> to vector<64x128xbf16>
    %c0_6 = arith.constant 0 : index
    %c0_7 = arith.constant 0 : index
    %9 = vector.load %arg4[%c0_6, %c0_7] : memref<64x128xbf16, #tpu.memory_space<vmem>>, vector<64x128xbf16>
    tpu.vector_store %arg4[%c0_6, %c0_7], %8 {strides = array<i32>} : memref<64x128xbf16, #tpu.memory_space<vmem>>, vector<64x128xbf16>,
    return
  }
  func.func @transform_0(%arg0: i32) -> (i32, i32) {
    %c0_i32 = arith.constant 0 : i32
    %c0_i32_0 = arith.constant 0 : i32
    return %arg0, %c0_i32 : i32, i32
  }
  func.func @transform_1(%arg0: i32) -> (i32, i32) {
    %c0_i32 = arith.constant 0 : i32
    %c0_i32_0 = arith.constant 0 : i32
    %c0_i32_1 = arith.constant 0 : i32
    return %c0_i32, %c0_i32_0 : i32, i32
  }
  func.func @transform_2(%arg0: i32) -> (i32, i32) {
    %c0_i32 = arith.constant 0 : i32
    %c0_i32_0 = arith.constant 0 : i32
    %c0_i32_1 = arith.constant 0 : i32
    return %c0_i32, %c0_i32_0 : i32, i32
  }
  func.func @transform_3(%arg0: i32) -> (i32, i32) {
    %c0_i32 = arith.constant 0 : i32
    %c0_i32_0 = arith.constant 0 : i32
    return %arg0, %c0_i32 : i32, i32
  }
}

module attributes {stable_mosaic.version = 11 : i64} {
  func.func @_matmul_bias_act_kernel(%arg0: i32, %arg1: memref<64x76xbf16, #tpu.memory_space<vmem>>, %arg2: memref<76x128xbf16, #tpu.memory_space<vmem>>, %arg3: memref<1x128xf32, #tpu.memory_space<vmem>>, %arg4: memref<64x128xbf16, #tpu.memory_space<vmem>>) attributes {dimension_semantics = [#tpu.dimension_semantics<parallel>], iteration_bounds = array<i64: 2>, scalar_prefetch = 0 : i64, scratch_operands = 0 : i64, tpu.core_type = #tpu.core_type<tc>, window_params = [{transform_indices = @transform_0, window_bounds = array<i64: 64, 76>}, {pipeline_mode = #tpu.pipeline_mode<synchronous>, transform_indices = @transform_1, window_bounds = array<i64: 76, 128>}, {pipeline_mode = #tpu.pipeline_mode<synchronous>, transform_indices = @transform_2, window_bounds = array<i64: 1, 128>}, {transform_indices = @transform_3, window_bounds = array<i64: 64, 128>}]} {
    %c0 = arith.constant 0 : index
    %c0_0 = arith.constant 0 : index
    %0 = vector.load %arg1[%c0, %c0_0] : memref<64x76xbf16, #tpu.memory_space<vmem>>, vector<64x76xbf16>
    %c0_1 = arith.constant 0 : index
    %c0_2 = arith.constant 0 : index
    %1 = vector.load %arg2[%c0_1, %c0_2] : memref<76x128xbf16, #tpu.memory_space<vmem>>, vector<76x128xbf16>
    %cst = arith.constant dense<0.000000e+00> : vector<64x128xf32>
    %2 = tpu.matmul %0, %1, %cst {dimension_numbers = #tpu.dot_dimension_numbers<[1], [0], [0], [1], [0, 0, 1, 1], [], []>} : vector<64x76xbf16>, vector<76x128xbf16>, vector<64x128xf32> -> vector<64x128xf32>
    %c0_3 = arith.constant 0 : index
    %c0_4 = arith.constant 0 : index
    %3 = vector.load %arg3[%c0_3, %c0_4] : memref<1x128xf32, #tpu.memory_space<vmem>>, vector<1x128xf32>
    %4 = vector.broadcast %3 : vector<1x128xf32> to vector<64x128xf32>
    %5 = arith.addf %2, %4 : vector<64x128xf32>
    %cst_5 = arith.constant 0.000000e+00 : f32
    %6 = vector.broadcast %cst_5 : f32 to vector<64x128xf32>
    %7 = arith.maximumf %5, %6 : vector<64x128xf32>
    %8 = arith.truncf %7 : vector<64x128xf32> to vector<64x128xbf16>
    %c0_6 = arith.constant 0 : index
    %c0_7 = arith.constant 0 : index
    %9 = vector.load %arg4[%c0_6, %c0_7] : memref<64x128xbf16, #tpu.memory_space<vmem>>, vector<64x128xbf16>
    tpu.vector_store %arg4[%c0_6, %c0_7], %8 {strides = array<i32>} : memref<64x128xbf16, #tpu.memory_space<vmem>>, vector<64x128xbf16>,
    return
  }
  func.func @transform_0(%arg0: i32) -> (i32, i32) {
    %c0_i32 = arith.constant 0 : i32
    %c0_i32_0 = arith.constant 0 : i32
    return %arg0, %c0_i32 : i32, i32
  }
  func.func @transform_1(%arg0: i32) -> (i32, i32) {
    %c0_i32 = arith.constant 0 : i32
    %c0_i32_0 = arith.constant 0 : i32
    %c0_i32_1 = arith.constant 0 : i32
    return %c0_i32, %c0_i32_0 : i32, i32
  }
  func.func @transform_2(%arg0: i32) -> (i32, i32) {
    %c0_i32 = arith.constant 0 : i32
    %c0_i32_0 = arith.constant 0 : i32
    %c0_i32_1 = arith.constant 0 : i32
    return %c0_i32, %c0_i32_0 : i32, i32
  }
  func.func @transform_3(%arg0: i32) -> (i32, i32) {
    %c0_i32 = arith.constant 0 : i32
    %c0_i32_0 = arith.constant 0 : i32
    return %arg0, %c0_i32 : i32, i32
  }
}

</mosaic_0001>

<llo_original>
// kernel: basic_block_forward.2
$region0: #{basic_block_forward.2}
  #allocation0 [shape = 'u32[]', space=smem, size = 0x4, offset = 0x4, fixed_abs, tag = 'smem constant byte address 0x4 - core index']
  #allocation1 [shape = 'u32[144,128]{1,0:T(1,128)}', space=vmem, size = 0x12000, scoped, tag = 'internal scratch']
  %s0 = inlined_call_operand.vmem [shape: bf16[128,36], index: 0, kind: input, shape index: {}]
  %s1 = inlined_call_operand.vmem [shape: bf16[36,128], index: 1, kind: input, shape index: {}]
  %s2 = inlined_call_operand.vmem [shape: f32[1,128], index: 2, kind: input, shape index: {}]
  %s3 = inlined_call_operand.vmem [shape: bf16[128,128], index: 3, kind: output, shape index: {}]
  %s4 = sld [smem:[#allocation0]]
  $region45: #{basic_block_forward.2} parent=0
    _
  %s6 = ssub.s32 1, %s4
  %s7 = scalar_select 0, %s6, %s4
  loop: start=0, step=1, limit=4
  $region2: #{basic_block_forward.2} parent=0 // loop_pre_header
    _
  $region3: #{basic_block_forward.2} parent=0 // loop_header
    %s9 = sphi 0, %s13
    %p10 = scmp.ge.s32.totalorder %s9, 4
    %s19 = sphi 0, %s21
    %s22 = sphi 0, %s19
    %s23 = sphi 0, %s22
    %s39 = sphi 0, %s23
    %s43 = sphi 0, %s43
    %s45 = sphi 0, %s43
    %s46 = sphi 0, %s45
    %s60 = sphi 0, %s46
    %s64 = sphi 0, %s64
    %s66 = sphi 0, %s64
    %s67 = sphi 0, %s66
    %s81 = sphi 0, %s67
    %s87 = sphi 0, %s89
    %s90 = sphi 0, %s87
    %s91 = sphi 0, %s90
    %s107 = sphi 0, %s91
  $region4: #{basic_block_forward.2} parent=0 // loop_header_branch
    %12 = sbr.rel (%p10) target = $region8
  $region5: #{basic_block_forward.2} parent=0 // loop_body
    %s14 = ssub.s32 %s9, 1
    %s15 = ssub.s32 %s9, 2
    %s16 = sadd.s32 %s9, 1
    %s17 = ssub.s32 %s9, %s16
    %p18 = scmp.eq.s32.totalorder %s17, 0
    %s20 = sadd.s32 %s19, 1
    %s21 = scalar_select %p18, %s19, %s20
    %p24 = pneg %p18
    %p25 = scmp.eq.s32.totalorder %s9, 1
    %p26 = por %p24, %p25
    %p27 = scmp.ne.s32.totalorder %s19, %s22
    %p28 = scmp.eq.s32.totalorder %s9, 0
    %p29 = por %p27, %p28
    %p30 = scmp.ne.s32.totalorder %s19, %s22
    %p31 = scmp.eq.s32.totalorder %s14, 1
    %p32 = por %p30, %p31
    %p33 = scmp.ne.s32.totalorder %s22, %s23
    %p34 = scmp.eq.s32.totalorder %s14, 0
    %p35 = por %p33, %p34
    %p36 = scmp.ne.s32.totalorder %s22, %s23
    %p37 = scmp.eq.s32.totalorder %s15, 1
    %p38 = por %p36, %p37
    %p40 = scmp.ne.s32.totalorder %s23, %s39
    %p41 = scmp.eq.s32.totalorder %s15, 0
    %p42 = por %p40, %p41
    %s44 = sadd.s32 %s43, 1
    %p47 = scmp.eq.s32.totalorder %s9, 1
    %p48 = scmp.ne.s32.totalorder %s43, %s45
    %p49 = scmp.eq.s32.totalorder %s9, 0
    %p50 = por %p48, %p49
    %p51 = scmp.ne.s32.totalorder %s43, %s45
    %p52 = scmp.eq.s32.totalorder %s14, 1
    %p53 = por %p51, %p52
    %p54 = scmp.ne.s32.totalorder %s45, %s46
    %p55 = scmp.eq.s32.totalorder %s14, 0
    %p56 = por %p54, %p55
    %p57 = scmp.ne.s32.totalorder %s45, %s46
    %p58 = scmp.eq.s32.totalorder %s15, 1
    %p59 = por %p57, %p58
    %p61 = scmp.ne.s32.totalorder %s46, %s60
    %p62 = scmp.eq.s32.totalorder %s15, 0
    %p63 = por %p61, %p62
    %s65 = sadd.s32 %s64, 1
    %p68 = scmp.eq.s32.totalorder %s9, 1
    %p69 = scmp.ne.s32.totalorder %s64, %s66
    %p70 = scmp.eq.s32.totalorder %s9, 0
    %p71 = por %p69, %p70
    %p72 = scmp.ne.s32.totalorder %s64, %s66
    %p73 = scmp.eq.s32.totalorder %s14, 1
    %p74 = por %p72, %p73
    %p75 = scmp.ne.s32.totalorder %s66, %s67
    %p76 = scmp.eq.s32.totalorder %s14, 0
    %p77 = por %p75, %p76
    %p78 = scmp.ne.s32.totalorder %s66, %s67
    %p79 = scmp.eq.s32.totalorder %s15, 1
    %p80 = por %p78, %p79
    %p82 = scmp.ne.s32.totalorder %s67, %s81
    %p83 = scmp.eq.s32.totalorder %s15, 0
    %p84 = por %p82, %p83
    %s85 = ssub.s32 %s9, %s16
    %p86 = scmp.eq.s32.totalorder %s85, 0
    %s88 = sadd.s32 %s87, 1
    %s89 = scalar_select %p86, %s87, %s88
    %p92 = pneg %p86
    %p93 = scmp.eq.s32.totalorder %s9, 1
    %p94 = por %p92, %p93
    %p95 = scmp.ne.s32.totalorder %s87, %s90
    %p96 = scmp.eq.s32.totalorder %s9, 0
    %p97 = por %p95, %p96
    %p98 = scmp.ne.s32.totalorder %s87, %s90
    %p99 = scmp.eq.s32.totalorder %s14, 1
    %p100 = por %p98, %p99
    %p101 = scmp.ne.s32.totalorder %s90, %s91
    %p102 = scmp.eq.s32.totalorder %s14, 0
    %p103 = por %p101, %p102
    %p104 = scmp.ne.s32.totalorder %s90, %s91
    %p105 = scmp.eq.s32.totalorder %s15, 1
    %p106 = por %p104, %p105
    %p108 = scmp.ne.s32.totalorder %s91, %s107
    %p109 = scmp.eq.s32.totalorder %s15, 0
    %p110 = por %p108, %p109
    %p111 = scmp.le.s32.totalorder 1, %s9
    %p112 = scmp.lt.s32.totalorder %s9, 3
    %p113 = pnand %p111, %p112
    %p114 = pneg %p113
    // Predicated region
    $region9: #{basic_block_forward.2} parent=5 // pred_check
      _
    $region10: #{basic_block_forward.2} parent=5 // pred_check_branch
      %116 = sbr.rel (%p113) target = $region12
    $region11: #{basic_block_forward.2} parent=5 // pred_region
      %s117 = ssub.s32 %s9, 1
      // Predicated region
      $region13: #{basic_block_forward.2} parent=11 // pred_check
        %p118 = pneg %p56
      $region14: #{basic_block_forward.2} parent=11 // pred_check_branch
        %120 = sbr.rel (%p118) target = $region16
      $region15: #{basic_block_forward.2} parent=11 // pred_region
        _
      $region16: #{basic_block_forward.2} parent=11 // pred_fallthru
        _
      // Predicated region
      $region17: #{basic_block_forward.2} parent=11 // pred_check
        %p121 = pneg %p77
      $region18: #{basic_block_forward.2} parent=11 // pred_check_branch
        %123 = sbr.rel (%p121) target = $region20
      $region19: #{basic_block_forward.2} parent=11 // pred_region
        _
      $region20: #{basic_block_forward.2} parent=11 // pred_fallthru
        _
    $region12: #{basic_block_forward.2} parent=5 // pred_fallthru
      _
    %p124 = scmp.lt.s32.totalorder %s9, 2
    // Predicated region
    $region21: #{basic_block_forward.2} parent=5 // pred_check
      %p125 = pneg %p124
    $region22: #{basic_block_forward.2} parent=5 // pred_check_branch
      %127 = sbr.rel (%p125) target = $region24
    $region23: #{basic_block_forward.2} parent=5 // pred_region
      // Predicated region
      $region25: #{basic_block_forward.2} parent=23 // pred_check
        %p128 = pneg %p29
      $region26: #{basic_block_forward.2} parent=23 // pred_check_branch
        %130 = sbr.rel (%p128) target = $region28
      $region27: #{basic_block_forward.2} parent=23 // pred_region
        %s131 = smul.u32 8, %s9
        %p132 = scmp.lt.s32.totalorder %s131, 15
        %s133 = scalar_select %p132, %s131, 15
        %s134 = smul.addr %s133, 4
        %s135 = scalar_lea.vmem %s0, %s134
        %s136 = smul.u32 8, %s9
      $region28: #{basic_block_forward.2} parent=23 // pred_fallthru
        _
    $region24: #{basic_block_forward.2} parent=5 // pred_fallthru
      _
    %p137 = scmp.le.s32.totalorder 1, %s9
    %p138 = scmp.lt.s32.totalorder %s9, 3
    %p139 = pnand %p137, %p138
    %p140 = pneg %p139
    // Predicated region
    $region29: #{basic_block_forward.2} parent=5 // pred_check
      _
    $region30: #{basic_block_forward.2} parent=5 // pred_check_branch
      %142 = sbr.rel (%p139) target = $region32
    $region31: #{basic_block_forward.2} parent=5 // pred_region
      %s143 = ssub.s32 %s9, 1
      %s144 = smul.u32 8, %s14
      %p145 = scmp.lt.s32.totalorder %s144, 15
      %s146 = scalar_select %p145, %s144, 15
      %s147 = smul.addr %s146, 4
      %s148 = scalar_lea.vmem %s0, %s147
      %p149 = pneg %p35
      %p150 = pneg %p32
      %p151 = pneg %p56
      %p152 = pneg %p53
      %p153 = pneg %p77
      %p154 = pneg %p74
      %p155 = pneg %p103
      %p156 = pneg %p100
      %s157 = smul.u32 8, %s14
      %p158 = scmp.lt.s32.totalorder %s157, 15
      %s159 = scalar_select %p158, %s157, 15
      %s160 = smul.addr %s159, 4
      %s161 = scalar_lea.vmem %s3, %s160
      %s162 = smul.u32 8, %s14
      %p163 = scmp.lt.s32.totalorder %s162, 15
      %s164 = scalar_select %p163, %s162, 15
      %s165 = smul.addr %s164, 4
      %s166 = scalar_lea.vmem %s0, %s165
      %s167 = smul.u32 8, %s14
      %s168 = smul.u32 8, %s14
      %p169 = scmp.lt.s32.totalorder %s168, 15
      %s170 = scalar_select %p169, %s168, 15
      %s171 = smul.addr %s170, 4
      %s172 = scalar_lea.vmem %s3, %s171
      %s173 = smul.u32 8, %s14
      %v175 = vld [vmem:[%s166] sm:$0xf]
      %v176 = vld [vmem:[%s166 + $0x4] sm:$0xf]
      %v177 = vld [vmem:[%s166 + $0x8] sm:$0xf]
      %v178 = vld [vmem:[%s166 + $0xc] sm:$0xf]
      %v179 = vld [vmem:[%s166 + $0x10] sm:$0xf]
      %v180 = vld [vmem:[%s166 + $0x14] sm:$0xf]
      %v181 = vld [vmem:[%s166 + $0x18] sm:$0xf]
      %v182 = vld [vmem:[%s166 + $0x1c] sm:$0xf]
      %v183 = vld [vmem:[%s1] sm:$0xf]
      %v184 = vld [vmem:[%s1 + $0x4] sm:$0xf]
      %v185 = vld [vmem:[%s1 + $0x8] sm:$0xf]
      %v186 = vld [vmem:[%s1 + $0xc] sm:$0xf]
      %v187 = vld [vmem:[%s1 + $0x10] sm:$0x3]
      %v188 = vld [vmem:[%s2] sm:$0x1]
      %v190 = vlaneseq
      %v191 = vshrl.u32 %v190, 7
      %v192 = vsub.s32 0, %v191
      %v193 = vrot.slane %v188, %v192
      %v203 = vunpack.c.l.b16 %v175
      %v204 = vunpack.c.l.b16 %v176
      %v205 = vunpack.c.l.b16 %v177
      %v206 = vunpack.c.l.b16 %v178
      %v207 = vunpack.c.l.b16 %v179
      %v208 = vunpack.c.l.b16 %v180
      %v209 = vunpack.c.l.b16 %v181
      %v210 = vunpack.c.l.b16 %v182
      %v211 = vpack.c.b16 %v204, %v203
      %v212 = vpack.c.b16 %v206, %v205
      %v213 = vpack.c.b16 %v208, %v207
      %v214 = vpack.c.b16 %v210, %v209
      %v220 = vunpack.c.l.b16 %v183
      %v221 = vunpack.c.l.b16 %v184
      %v222 = vunpack.c.l.b16 %v185
      %v223 = vunpack.c.l.b16 %v186
      %v224 = vunpack.c.l.b16 %v187
      %v225 = vpack.c.b16 %v221, %v220
      %v226 = vpack.c.b16 %v223, %v222
      %v227 = vpack.c.b16 %v224, %v224
      %vm230 = vcmask 293888
      %v232 = vsel %vm230, %v211, 0
      %v235 = vsel %vm230, %v212, 0
      %v238 = vsel %vm230, %v213, 0
      %v241 = vsel %vm230, %v214, 0
      %vm243 = vcmask 1041408
      %v245 = vsel %vm243, %v227, 0
      %247 = vmatprep.subr.bf16.mxu0 0
      %248 = vmatpush1.bf16.msra.mxu0 %v225
      %249 = vmatprep.subr.bf16.mxu0 0
      %250 = vmatpush1.bf16.msra.mxu0 %v226
      %251 = vmatprep.subr.bf16.mxu0 0
      %252 = vmatpush1.bf16.msra.mxu0 %v245
      %253 = vmatprep.subr.bf16.mxu0 0
      %254 = vmatpush1.bf16.msra.mxu0 0
      %255 = vmatprep.subr.bf16.mxu0 0
      %256 = vmatpush1.bf16.msra.mxu0 0
      %257 = vmatprep.subr.bf16.mxu0 0
      %258 = vmatpush1.bf16.msra.mxu0 0
      %259 = vmatprep.subr.bf16.mxu0 0
      %260 = vmatpush1.bf16.msra.mxu0 0
      %261 = vmatprep.subr.bf16.mxu0 0
      %262 = vmatpush1.bf16.msra.mxu0 0
      %263 = vmatprep.subr.bf16.mxu0 0
      %264 = vmatpush1.bf16.msra.mxu0 0
      %265 = vmatprep.subr.bf16.mxu0 0
      %266 = vmatpush1.bf16.msra.mxu0 0
      %267 = vmatprep.subr.bf16.mxu0 0
      %268 = vmatpush1.bf16.msra.mxu0 0
      %269 = vmatprep.subr.bf16.mxu0 0
      %270 = vmatpush1.bf16.msra.mxu0 0
      %271 = vmatprep.subr.bf16.mxu0 0
      %272 = vmatpush1.bf16.msra.mxu0 0
      %273 = vmatprep.subr.bf16.mxu0 0
      %274 = vmatpush1.bf16.msra.mxu0 0
      %275 = vmatprep.subr.bf16.mxu0 0
      %276 = vmatpush1.bf16.msra.mxu0 0
      %277 = vmatprep.subr.bf16.mxu0 0
      %278 = vmatpush1.bf16.msra.mxu0 0
      %279 = vmatprep.mubr.bf16.mxu0 0
      %280 = vmatmul.mubr.bf16.gmra.mrb[0].mxu0 %v232
      %v281 = vpop.f32.mrb[0].mxu0
      %v282 = vadd.f32 %v193, %v281
      %v283 = vpop.f32.mrb[0].mxu0
      %v284 = vpop.f32.mrb[0].mxu0
      %v285 = vadd.f32 %v193, %v284
      %v286 = vpop.f32.mrb[0].mxu0
      %287 = vmatprep.mubr.bf16.mxu0 0
      %288 = vmatmul.mubr.bf16.gmra.mrb[0].mxu0 %v235
      %v289 = vpop.f32.mrb[0].mxu0
      %v290 = vadd.f32 %v193, %v289
      %v291 = vpop.f32.mrb[0].mxu0
      %v292 = vpop.f32.mrb[0].mxu0
      %v293 = vadd.f32 %v193, %v292
      %v294 = vpop.f32.mrb[0].mxu0
      %295 = vmatprep.mubr.bf16.mxu0 0
      %296 = vmatmul.mubr.bf16.gmra.mrb[0].mxu0 %v238
      %v297 = vpop.f32.mrb[0].mxu0
      %v298 = vadd.f32 %v193, %v297
      %v299 = vpop.f32.mrb[0].mxu0
      %v300 = vpop.f32.mrb[0].mxu0
      %v301 = vadd.f32 %v193, %v300
      %v302 = vpop.f32.mrb[0].mxu0
      %303 = vmatprep.mubr.bf16.mxu0 0
      %304 = vmatmul.mubr.bf16.gmra.mrb[0].mxu0 %v241
      %v305 = vpop.f32.mrb[0].mxu0
      %v306 = vadd.f32 %v193, %v305
      %v307 = vpop.f32.mrb[0].mxu0
      %v308 = vpop.f32.mrb[0].mxu0
      %v309 = vadd.f32 %v193, %v308
      %v310 = vpop.f32.mrb[0].mxu0
      %311 = vdwg.mxu0
      %v312 = vmax.f32 %v282, 0.0
      %v313 = vmax.f32 %v285, 0.0
      %v314 = vmax.f32 %v290, 0.0
      %v315 = vmax.f32 %v293, 0.0
      %v316 = vmax.f32 %v298, 0.0
      %v317 = vmax.f32 %v301, 0.0
      %v318 = vmax.f32 %v306, 0.0
      %v319 = vmax.f32 %v309, 0.0
      %v320 = vpack.c.bf16 %v313, %v312
      %v321 = vpack.c.bf16 %v315, %v314
      %v322 = vpack.c.bf16 %v317, %v316
      %v323 = vpack.c.bf16 %v319, %v318
      %v328 = vunpack.c.l.b16 %v320
      %v329 = vunpack.c.h.b16 %v320
      %v330 = vunpack.c.l.b16 %v321
      %v331 = vunpack.c.h.b16 %v321
      %v332 = vunpack.c.l.b16 %v322
      %v333 = vunpack.c.h.b16 %v322
      %v334 = vunpack.c.l.b16 %v323
      %v335 = vunpack.c.h.b16 %v323
      %v336 = vpack.c.b16 %v328, %v328
      %v337 = vpack.c.b16 %v329, %v329
      %v338 = vpack.c.b16 %v330, %v330
      %v339 = vpack.c.b16 %v331, %v331
      %v340 = vpack.c.b16 %v332, %v332
      %v341 = vpack.c.b16 %v333, %v333
      %v342 = vpack.c.b16 %v334, %v334
      %v343 = vpack.c.b16 %v335, %v335
      %352 = vst [vmem:[%s172] sm:$0xf] %v336
      %353 = vst [vmem:[%s172 + $0x4] sm:$0xf] %v337
      %354 = vst [vmem:[%s172 + $0x8] sm:$0xf] %v338
      %355 = vst [vmem:[%s172 + $0xc] sm:$0xf] %v339
      %356 = vst [vmem:[%s172 + $0x10] sm:$0xf] %v340
      %357 = vst [vmem:[%s172 + $0x14] sm:$0xf] %v341
      %358 = vst [vmem:[%s172 + $0x18] sm:$0xf] %v342
      %359 = vst [vmem:[%s172 + $0x1c] sm:$0xf] %v343
      %s360 = smul.u32 8, %s14
      %p361 = scmp.lt.s32.totalorder %s360, 15
      %s362 = scalar_select %p361, %s360, 15
      %s363 = smul.addr %s362, 4
      %s364 = scalar_lea.vmem %s3, %s363
      // Predicated region
      $region33: #{basic_block_forward.2} parent=31 // pred_check
        %p365 = pneg %p100
      $region34: #{basic_block_forward.2} parent=31 // pred_check_branch
        %367 = sbr.rel (%p365) target = $region36
      $region35: #{basic_block_forward.2} parent=31 // pred_region
        %s368 = smul.u32 8, %s14
      $region36: #{basic_block_forward.2} parent=31 // pred_fallthru
        _
    $region32: #{basic_block_forward.2} parent=5 // pred_fallthru
      _
    %p369 = scmp.le.s32.totalorder 2, %s9
    // Predicated region
    $region37: #{basic_block_forward.2} parent=5 // pred_check
      %p370 = pneg %p369
    $region38: #{basic_block_forward.2} parent=5 // pred_check_branch
      %372 = sbr.rel (%p370) target = $region40
    $region39: #{basic_block_forward.2} parent=5 // pred_region
      %s373 = ssub.s32 %s9, 2
      // Predicated region
      $region41: #{basic_block_forward.2} parent=39 // pred_check
        %p374 = pneg %p106
      $region42: #{basic_block_forward.2} parent=39 // pred_check_branch
        %376 = sbr.rel (%p374) target = $region44
      $region43: #{basic_block_forward.2} parent=39 // pred_region
        %s377 = smul.u32 8, %s15
        %p378 = scmp.lt.s32.totalorder %s377, 15
        %s379 = scalar_select %p378, %s377, 15
        %s380 = smul.addr %s379, 4
        %s381 = scalar_lea.vmem %s3, %s380
      $region44: #{basic_block_forward.2} parent=39 // pred_fallthru
        _
    $region40: #{basic_block_forward.2} parent=5 // pred_fallthru
      _
  $region6: #{basic_block_forward.2} parent=0 // loop_footer
    %s13 = sadd.s32 1, %s9
  $region7: #{basic_block_forward.2} parent=0 // loop_footer_branch
    %8 = sbr.rel target = $region3
  $region8: #{basic_block_forward.2} parent=0 // loop_exit
    _

// kernel: basic_block_forward.3
$region0: #{basic_block_forward.3}
  #allocation0 [shape = 'u32[]', space=smem, size = 0x4, offset = 0x4, fixed_abs, tag = 'smem constant byte address 0x4 - core index']
  #allocation1 [shape = 'u32[144,128]{1,0:T(1,128)}', space=vmem, size = 0x12000, scoped, tag = 'internal scratch']
  %s0 = inlined_call_operand.vmem [shape: bf16[128,76], index: 0, kind: input, shape index: {}]
  %s1 = inlined_call_operand.vmem [shape: bf16[76,128], index: 1, kind: input, shape index: {}]
  %s2 = inlined_call_operand.vmem [shape: f32[1,128], index: 2, kind: input, shape index: {}]
  %s3 = inlined_call_operand.hbm [shape: bf16[128,128], index: 3, kind: output, shape index: {}]
  %s4 = sld [smem:[#allocation0]]
  $region45: #{basic_block_forward.3} parent=0
    _
  %s6 = ssub.s32 1, %s4
  %s7 = scalar_select 0, %s6, %s4
  $region1: #{basic_block_forward.3} parent=0
    #allocation2 [shape = 'u8[32768]{0}', space=vmem, size = 0x8000, scoped, tag = 'output window, operand 0']
    #allocation3 [shape = 's32[2]{0}', space=sflag, size = 0x8, scoped, tag = 'scoped memory for basic_block_forward.3']
    %8 = vsyncpa [#allocation3], 0
    %s9 = scalar_lea.sflag [#allocation3], 1
    %10 = vsyncpa %s9, 0
    loop: start=0, step=1, limit=4
    $region2: #{basic_block_forward.3} parent=1 // loop_pre_header
      _
    $region3: #{basic_block_forward.3} parent=1 // loop_header
      %s12 = sphi 0, %s16
      %p13 = scmp.ge.s32.totalorder %s12, 4
      %s22 = sphi 0, %s24
      %s25 = sphi 0, %s22
      %s26 = sphi 0, %s25
      %s42 = sphi 0, %s26
      %s46 = sphi 0, %s46
      %s48 = sphi 0, %s46
      %s49 = sphi 0, %s48
      %s63 = sphi 0, %s49
      %s67 = sphi 0, %s67
      %s69 = sphi 0, %s67
      %s70 = sphi 0, %s69
      %s84 = sphi 0, %s70
      %s90 = sphi 0, %s92
      %s93 = sphi 0, %s90
      %s94 = sphi 0, %s93
      %s110 = sphi 0, %s94
    $region4: #{basic_block_forward.3} parent=1 // loop_header_branch
      %15 = sbr.rel (%p13) target = $region8
    $region5: #{basic_block_forward.3} parent=1 // loop_body
      %s17 = ssub.s32 %s12, 1
      %s18 = ssub.s32 %s12, 2
      %s19 = sadd.s32 %s12, 1
      %s20 = ssub.s32 %s12, %s19
      %p21 = scmp.eq.s32.totalorder %s20, 0
      %s23 = sadd.s32 %s22, 1
      %s24 = scalar_select %p21, %s22, %s23
      %p27 = pneg %p21
      %p28 = scmp.eq.s32.totalorder %s12, 1
      %p29 = por %p27, %p28
      %p30 = scmp.ne.s32.totalorder %s22, %s25
      %p31 = scmp.eq.s32.totalorder %s12, 0
      %p32 = por %p30, %p31
      %p33 = scmp.ne.s32.totalorder %s22, %s25
      %p34 = scmp.eq.s32.totalorder %s17, 1
      %p35 = por %p33, %p34
      %p36 = scmp.ne.s32.totalorder %s25, %s26
      %p37 = scmp.eq.s32.totalorder %s17, 0
      %p38 = por %p36, %p37
      %p39 = scmp.ne.s32.totalorder %s25, %s26
      %p40 = scmp.eq.s32.totalorder %s18, 1
      %p41 = por %p39, %p40
      %p43 = scmp.ne.s32.totalorder %s26, %s42
      %p44 = scmp.eq.s32.totalorder %s18, 0
      %p45 = por %p43, %p44
      %s47 = sadd.s32 %s46, 1
      %p50 = scmp.eq.s32.totalorder %s12, 1
      %p51 = scmp.ne.s32.totalorder %s46, %s48
      %p52 = scmp.eq.s32.totalorder %s12, 0
      %p53 = por %p51, %p52
      %p54 = scmp.ne.s32.totalorder %s46, %s48
      %p55 = scmp.eq.s32.totalorder %s17, 1
      %p56 = por %p54, %p55
      %p57 = scmp.ne.s32.totalorder %s48, %s49
      %p58 = scmp.eq.s32.totalorder %s17, 0
      %p59 = por %p57, %p58
      %p60 = scmp.ne.s32.totalorder %s48, %s49
      %p61 = scmp.eq.s32.totalorder %s18, 1
      %p62 = por %p60, %p61
      %p64 = scmp.ne.s32.totalorder %s49, %s63
      %p65 = scmp.eq.s32.totalorder %s18, 0
      %p66 = por %p64, %p65
      %s68 = sadd.s32 %s67, 1
      %p71 = scmp.eq.s32.totalorder %s12, 1
      %p72 = scmp.ne.s32.totalorder %s67, %s69
      %p73 = scmp.eq.s32.totalorder %s12, 0
      %p74 = por %p72, %p73
      %p75 = scmp.ne.s32.totalorder %s67, %s69
      %p76 = scmp.eq.s32.totalorder %s17, 1
      %p77 = por %p75, %p76
      %p78 = scmp.ne.s32.totalorder %s69, %s70
      %p79 = scmp.eq.s32.totalorder %s17, 0
      %p80 = por %p78, %p79
      %p81 = scmp.ne.s32.totalorder %s69, %s70
      %p82 = scmp.eq.s32.totalorder %s18, 1
      %p83 = por %p81, %p82
      %p85 = scmp.ne.s32.totalorder %s70, %s84
      %p86 = scmp.eq.s32.totalorder %s18, 0
      %p87 = por %p85, %p86
      %s88 = ssub.s32 %s12, %s19
      %p89 = scmp.eq.s32.totalorder %s88, 0
      %s91 = sadd.s32 %s90, 1
      %s92 = scalar_select %p89, %s90, %s91
      %p95 = pneg %p89
      %p96 = scmp.eq.s32.totalorder %s12, 1
      %p97 = por %p95, %p96
      %p98 = scmp.ne.s32.totalorder %s90, %s93
      %p99 = scmp.eq.s32.totalorder %s12, 0
      %p100 = por %p98, %p99
      %p101 = scmp.ne.s32.totalorder %s90, %s93
      %p102 = scmp.eq.s32.totalorder %s17, 1
      %p103 = por %p101, %p102
      %p104 = scmp.ne.s32.totalorder %s93, %s94
      %p105 = scmp.eq.s32.totalorder %s17, 0
      %p106 = por %p104, %p105
      %p107 = scmp.ne.s32.totalorder %s93, %s94
      %p108 = scmp.eq.s32.totalorder %s18, 1
      %p109 = por %p107, %p108
      %p111 = scmp.ne.s32.totalorder %s94, %s110
      %p112 = scmp.eq.s32.totalorder %s18, 0
      %p113 = por %p111, %p112
      %p114 = scmp.le.s32.totalorder 1, %s12
      %p115 = scmp.lt.s32.totalorder %s12, 3
      %p116 = pnand %p114, %p115
      %p117 = pneg %p116
      // Predicated region
      $region9: #{basic_block_forward.3} parent=5 // pred_check
        _
      $region10: #{basic_block_forward.3} parent=5 // pred_check_branch
        %119 = sbr.rel (%p116) target = $region12
      $region11: #{basic_block_forward.3} parent=5 // pred_region
        %s120 = ssub.s32 %s12, 1
        // Predicated region
        $region13: #{basic_block_forward.3} parent=11 // pred_check
          %p121 = pneg %p59
        $region14: #{basic_block_forward.3} parent=11 // pred_check_branch
          %123 = sbr.rel (%p121) target = $region16
        $region15: #{basic_block_forward.3} parent=11 // pred_region
          _
        $region16: #{basic_block_forward.3} parent=11 // pred_fallthru
          _
        // Predicated region
        $region17: #{basic_block_forward.3} parent=11 // pred_check
          %p124 = pneg %p80
        $region18: #{basic_block_forward.3} parent=11 // pred_check_branch
          %126 = sbr.rel (%p124) target = $region20
        $region19: #{basic_block_forward.3} parent=11 // pred_region
          _
        $region20: #{basic_block_forward.3} parent=11 // pred_fallthru
          _
      $region12: #{basic_block_forward.3} parent=5 // pred_fallthru
        _
      %p127 = scmp.lt.s32.totalorder %s12, 2
      // Predicated region
      $region21: #{basic_block_forward.3} parent=5 // pred_check
        %p128 = pneg %p127
      $region22: #{basic_block_forward.3} parent=5 // pred_check_branch
        %130 = sbr.rel (%p128) target = $region24
      $region23: #{basic_block_forward.3} parent=5 // pred_region
        // Predicated region
        $region25: #{basic_block_forward.3} parent=23 // pred_check
          %p131 = pneg %p32
        $region26: #{basic_block_forward.3} parent=23 // pred_check_branch
          %133 = sbr.rel (%p131) target = $region28
        $region27: #{basic_block_forward.3} parent=23 // pred_region
          %s134 = smul.u32 8, %s12
          %p135 = scmp.lt.s32.totalorder %s134, 15
          %s136 = scalar_select %p135, %s134, 15
          %s137 = smul.addr %s136, 4
          %s138 = scalar_lea.vmem %s0, %s137
          %s139 = smul.u32 8, %s12
        $region28: #{basic_block_forward.3} parent=23 // pred_fallthru
          _
      $region24: #{basic_block_forward.3} parent=5 // pred_fallthru
        _
      %p140 = scmp.le.s32.totalorder 1, %s12
      %p141 = scmp.lt.s32.totalorder %s12, 3
      %p142 = pnand %p140, %p141
      %p143 = pneg %p142
      // Predicated region
      $region29: #{basic_block_forward.3} parent=5 // pred_check
        _
      $region30: #{basic_block_forward.3} parent=5 // pred_check_branch
        %145 = sbr.rel (%p142) target = $region32
      $region31: #{basic_block_forward.3} parent=5 // pred_region
        %s146 = ssub.s32 %s12, 1
        %s147 = smul.u32 8, %s17
        %p148 = scmp.lt.s32.totalorder %s147, 15
        %s149 = scalar_select %p148, %s147, 15
        %s150 = smul.addr %s149, 4
        %s151 = scalar_lea.vmem %s0, %s150
        %p152 = pneg %p38
        %p153 = pneg %p35
        %p154 = pneg %p59
        %p155 = pneg %p56
        %p156 = pneg %p80
        %p157 = pneg %p77
        %p158 = pneg %p106
        %p159 = pneg %p103
        %s160 = sand.u32 %s93, 1
        %s161 = scalar_lea.sflag [#allocation3], %s160
        %s162 = sand.u32 %s93, 1
        %s163 = smul.addr %s162, 32
        %s164 = scalar_lea.vmem [#allocation2], %s163
        %s165 = smul.u32 8, %s17
        %p166 = scmp.lt.s32.totalorder %s165, 15
        %s167 = scalar_select %p166, %s165, 15
        %s168 = smul.addr %s167, 4
        %s169 = scalar_lea.vmem %s0, %s168
        %s170 = smul.u32 8, %s17
        %s171 = smul.u32 8, %s17
        %v173 = vld [vmem:[%s169] sm:$0xf]
        %v174 = vld [vmem:[%s169 + $0x4] sm:$0xf]
        %v175 = vld [vmem:[%s169 + $0x8] sm:$0xf]
        %v176 = vld [vmem:[%s169 + $0xc] sm:$0xf]
        %v177 = vld [vmem:[%s169 + $0x10] sm:$0xf]
        %v178 = vld [vmem:[%s169 + $0x14] sm:$0xf]
        %v179 = vld [vmem:[%s169 + $0x18] sm:$0xf]
        %v180 = vld [vmem:[%s169 + $0x1c] sm:$0xf]
        %v181 = vld [vmem:[%s1] sm:$0xf]
        %v182 = vld [vmem:[%s1 + $0x4] sm:$0xf]
        %v183 = vld [vmem:[%s1 + $0x8] sm:$0xf]
        %v184 = vld [vmem:[%s1 + $0xc] sm:$0xf]
        %v185 = vld [vmem:[%s1 + $0x10] sm:$0xf]
        %v186 = vld [vmem:[%s1 + $0x14] sm:$0xf]
        %v187 = vld [vmem:[%s1 + $0x18] sm:$0xf]
        %v188 = vld [vmem:[%s1 + $0x1c] sm:$0xf]
        %v189 = vld [vmem:[%s1 + $0x20] sm:$0xf]
        %v190 = vld [vmem:[%s1 + $0x24] sm:$0x3]
        %v191 = vld [vmem:[%s2] sm:$0x1]
        %v193 = vlaneseq
        %v194 = vshrl.u32 %v193, 7
        %v195 = vsub.s32 0, %v194
        %v196 = vrot.slane %v191, %v195
        %v206 = vunpack.c.l.b16 %v173
        %v207 = vunpack.c.l.b16 %v174
        %v208 = vunpack.c.l.b16 %v175
        %v209 = vunpack.c.l.b16 %v176
        %v210 = vunpack.c.l.b16 %v177
        %v211 = vunpack.c.l.b16 %v178
        %v212 = vunpack.c.l.b16 %v179
        %v213 = vunpack.c.l.b16 %v180
        %v214 = vpack.c.b16 %v207, %v206
        %v215 = vpack.c.b16 %v209, %v208
        %v216 = vpack.c.b16 %v211, %v210
        %v217 = vpack.c.b16 %v213, %v212
        %v228 = vunpack.c.l.b16 %v181
        %v229 = vunpack.c.l.b16 %v182
        %v230 = vunpack.c.l.b16 %v183
        %v231 = vunpack.c.l.b16 %v184
        %v232 = vunpack.c.l.b16 %v185
        %v233 = vunpack.c.l.b16 %v186
        %v234 = vunpack.c.l.b16 %v187
        %v235 = vunpack.c.l.b16 %v188
        %v236 = vunpack.c.l.b16 %v189
        %v237 = vunpack.c.l.b16 %v190
        %v238 = vpack.c.b16 %v229, %v228
        %v239 = vpack.c.b16 %v231, %v230
        %v240 = vpack.c.b16 %v233, %v232
        %v241 = vpack.c.b16 %v235, %v234
        %v242 = vpack.c.b16 %v237, %v236
        %vm247 = vcmask 621568
        %v249 = vsel %vm247, %v214, 0
        %v252 = vsel %vm247, %v215, 0
        %v255 = vsel %vm247, %v216, 0
        %v258 = vsel %vm247, %v217, 0
        %vm260 = vcmask 1045504
        %v262 = vsel %vm260, %v242, 0
        %264 = vmatprep.subr.bf16.mxu0 0
        %265 = vmatpush1.bf16.msra.mxu0 %v238
        %266 = vmatprep.subr.bf16.mxu0 0
        %267 = vmatpush1.bf16.msra.mxu0 %v239
        %268 = vmatprep.subr.bf16.mxu0 0
        %269 = vmatpush1.bf16.msra.mxu0 %v240
        %270 = vmatprep.subr.bf16.mxu0 0
        %271 = vmatpush1.bf16.msra.mxu0 %v241
        %272 = vmatprep.subr.bf16.mxu0 0
        %273 = vmatpush1.bf16.msra.mxu0 %v262
        %274 = vmatprep.subr.bf16.mxu0 0
        %275 = vmatpush1.bf16.msra.mxu0 0
        %276 = vmatprep.subr.bf16.mxu0 0
        %277 = vmatpush1.bf16.msra.mxu0 0
        %278 = vmatprep.subr.bf16.mxu0 0
        %279 = vmatpush1.bf16.msra.mxu0 0
        %280 = vmatprep.subr.bf16.mxu0 0
        %281 = vmatpush1.bf16.msra.mxu0 0
        %282 = vmatprep.subr.bf16.mxu0 0
        %283 = vmatpush1.bf16.msra.mxu0 0
        %284 = vmatprep.subr.bf16.mxu0 0
        %285 = vmatpush1.bf16.msra.mxu0 0
        %286 = vmatprep.subr.bf16.mxu0 0
        %287 = vmatpush1.bf16.msra.mxu0 0
        %288 = vmatprep.subr.bf16.mxu0 0
        %289 = vmatpush1.bf16.msra.mxu0 0
        %290 = vmatprep.subr.bf16.mxu0 0
        %291 = vmatpush1.bf16.msra.mxu0 0
        %292 = vmatprep.subr.bf16.mxu0 0
        %293 = vmatpush1.bf16.msra.mxu0 0
        %294 = vmatprep.subr.bf16.mxu0 0
        %295 = vmatpush1.bf16.msra.mxu0 0
        %296 = vmatprep.mubr.bf16.mxu0 0
        %297 = vmatmul.mubr.bf16.gmra.mrb[0].mxu0 %v249
        %v298 = vpop.f32.mrb[0].mxu0
        %v299 = vadd.f32 %v196, %v298
        %v300 = vpop.f32.mrb[0].mxu0
        %v301 = vpop.f32.mrb[0].mxu0
        %v302 = vadd.f32 %v196, %v301
        %v303 = vpop.f32.mrb[0].mxu0
        %304 = vmatprep.mubr.bf16.mxu0 0
        %305 = vmatmul.mubr.bf16.gmra.mrb[0].mxu0 %v252
        %v306 = vpop.f32.mrb[0].mxu0
        %v307 = vadd.f32 %v196, %v306
        %v308 = vpop.f32.mrb[0].mxu0
        %v309 = vpop.f32.mrb[0].mxu0
        %v310 = vadd.f32 %v196, %v309
        %v311 = vpop.f32.mrb[0].mxu0
        %312 = vmatprep.mubr.bf16.mxu0 0
        %313 = vmatmul.mubr.bf16.gmra.mrb[0].mxu0 %v255
        %v314 = vpop.f32.mrb[0].mxu0
        %v315 = vadd.f32 %v196, %v314
        %v316 = vpop.f32.mrb[0].mxu0
        %v317 = vpop.f32.mrb[0].mxu0
        %v318 = vadd.f32 %v196, %v317
        %v319 = vpop.f32.mrb[0].mxu0
        %320 = vmatprep.mubr.bf16.mxu0 0
        %321 = vmatmul.mubr.bf16.gmra.mrb[0].mxu0 %v258
        %v322 = vpop.f32.mrb[0].mxu0
        %v323 = vadd.f32 %v196, %v322
        %v324 = vpop.f32.mrb[0].mxu0
        %v325 = vpop.f32.mrb[0].mxu0
        %v326 = vadd.f32 %v196, %v325
        %v327 = vpop.f32.mrb[0].mxu0
        %328 = vdwg.mxu0
        %v329 = vmax.f32 %v299, 0.0
        %v330 = vmax.f32 %v302, 0.0
        %v331 = vmax.f32 %v307, 0.0
        %v332 = vmax.f32 %v310, 0.0
        %v333 = vmax.f32 %v315, 0.0
        %v334 = vmax.f32 %v318, 0.0
        %v335 = vmax.f32 %v323, 0.0
        %v336 = vmax.f32 %v326, 0.0
        %v337 = vpack.c.bf16 %v330, %v329
        %v338 = vpack.c.bf16 %v332, %v331
        %v339 = vpack.c.bf16 %v334, %v333
        %v340 = vpack.c.bf16 %v336, %v335
        %v345 = vunpack.c.l.b16 %v337
        %v346 = vunpack.c.h.b16 %v337
        %v347 = vunpack.c.l.b16 %v338
        %v348 = vunpack.c.h.b16 %v338
        %v349 = vunpack.c.l.b16 %v339
        %v350 = vunpack.c.h.b16 %v339
        %v351 = vunpack.c.l.b16 %v340
        %v352 = vunpack.c.h.b16 %v340
        %v353 = vpack.c.b16 %v345, %v345
        %v354 = vpack.c.b16 %v346, %v346
        %v355 = vpack.c.b16 %v347, %v347
        %v356 = vpack.c.b16 %v348, %v348
        %v357 = vpack.c.b16 %v349, %v349
        %v358 = vpack.c.b16 %v350, %v350
        %v359 = vpack.c.b16 %v351, %v351
        %v360 = vpack.c.b16 %v352, %v352
        %369 = vst [vmem:[%s164] sm:$0xf] %v353
        %370 = vst [vmem:[%s164 + $0x4] sm:$0xf] %v354
        %371 = vst [vmem:[%s164 + $0x8] sm:$0xf] %v355
        %372 = vst [vmem:[%s164 + $0xc] sm:$0xf] %v356
        %373 = vst [vmem:[%s164 + $0x10] sm:$0xf] %v357
        %374 = vst [vmem:[%s164 + $0x14] sm:$0xf] %v358
        %375 = vst [vmem:[%s164 + $0x18] sm:$0xf] %v359
        %376 = vst [vmem:[%s164 + $0x1c] sm:$0xf] %v360
        %s377 = sand.u32 %s93, 1
        %s378 = scalar_lea.sflag [#allocation3], %s377
        %s379 = sand.u32 %s93, 1
        %s380 = smul.addr %s379, 32
        %s381 = scalar_lea.vmem [#allocation2], %s380
        // Predicated region
        $region33: #{basic_block_forward.3} parent=31 // pred_check
          %p382 = pneg %p103
        $region34: #{basic_block_forward.3} parent=31 // pred_check_branch
          %384 = sbr.rel (%p382) target = $region36
        $region35: #{basic_block_forward.3} parent=31 // pred_region
          %s385 = smul.u32 8, %s17
          %s387 = ssub.s32 512, 512
          %388 = vsyncadd %s378, %s387
          %s389 = smul.addr %s385, 64
          %s390 = scalar_lea.hbm %s3, %s389
          %s391 = sshll.u32 %s381, 4
          %s392 = int_to_ptr.vmem [resolvable:$true] %s391
          %397 = dma.vmem_to_hbm [thread:$0]  %s392, 512, %s390, %s378, 64, 64, 4
        $region36: #{basic_block_forward.3} parent=31 // pred_fallthru
          _
      $region32: #{basic_block_forward.3} parent=5 // pred_fallthru
        _
      %p398 = scmp.le.s32.totalorder 2, %s12
      // Predicated region
      $region37: #{basic_block_forward.3} parent=5 // pred_check
        %p399 = pneg %p398
      $region38: #{basic_block_forward.3} parent=5 // pred_check_branch
        %401 = sbr.rel (%p399) target = $region40
      $region39: #{basic_block_forward.3} parent=5 // pred_region
        %s402 = ssub.s32 %s12, 2
        // Predicated region
        $region41: #{basic_block_forward.3} parent=39 // pred_check
          %p403 = pneg %p109
        $region42: #{basic_block_forward.3} parent=39 // pred_check_branch
          %405 = sbr.rel (%p403) target = $region44
        $region43: #{basic_block_forward.3} parent=39 // pred_region
          %s406 = sand.u32 %s94, 1
          %s407 = scalar_lea.sflag [#allocation3], %s406
          %s408 = sand.u32 %s94, 1
          %s409 = smul.addr %s408, 32
          %s410 = scalar_lea.vmem [#allocation2], %s409
          %411 = dma.done %s407, 512
        $region44: #{basic_block_forward.3} parent=39 // pred_fallthru
          _
      $region40: #{basic_block_forward.3} parent=5 // pred_fallthru
        _
    $region6: #{basic_block_forward.3} parent=1 // loop_footer
      %s16 = sadd.s32 1, %s12
    $region7: #{basic_block_forward.3} parent=1 // loop_footer_branch
      %11 = sbr.rel target = $region3
    $region8: #{basic_block_forward.3} parent=1 // loop_exit
      _
    %412 = vsyncpa [#allocation3], 1
    %s413 = scalar_lea.sflag [#allocation3], 1
    %414 = vsyncpa %s413, 1

</llo_original>
